<compile_context>
chip_gen: v7x
topology: tpu7x:2x2x1
jax: 0.10.0
libtpu: 0.0.40
codegen_flags: <defaults>
</compile_context>

<pallas_src>
import functools

import jax
import jax.numpy as jnp
from jax.experimental import pallas as pl
from jax.experimental.pallas import tpu as pltpu


def _round_up(x: int, m: int) -> int:
    return ((x + m - 1) // m) * m


def sparse_mlp_kernel(x_ref, w_ref, b_ref, o_ref, acc_ref):
    """One (tile_B, tile_P) output tile; G is the reduction grid axis (axis 2)."""
    k = pl.program_id(2)

    # (tile_B, tile_G) bf16 @ (tile_G, tile_P) bf16 on the MXU, f32 accumulate.
    partial = jnp.dot(x_ref[...], w_ref[...], preferred_element_type=jnp.float32)

    @pl.when(k == 0)
    def _():
        acc_ref[...] = partial

    @pl.when(k != 0)
    def _():
        acc_ref[...] += partial

    @pl.when(k == pl.num_programs(2) - 1)
    def _():
        # bias add (VPU) + tanh (EUP) epilogue, all f32.
        o_ref[...] = jnp.tanh(acc_ref[...] + b_ref[...]).astype(o_ref.dtype)


def prepare_sparse_mlp_params(weight, mask, bias, *, tile_p=512, tile_g=1024):
    """Fold the sparsity mask into the weight ONCE, transpose to (G, P), cast to
    bf16 and pad to tile multiples.  Call once per parameter set and reuse."""
    P, G = weight.shape
    tp = tile_p if P >= tile_p else _round_up(P, 128)
    tg = tile_g if G >= tile_g else _round_up(G, 128)
    P_pad = _round_up(P, tp)
    G_pad = _round_up(G, tg)

    w_eff = (weight.astype(jnp.float32) * mask.astype(jnp.float32)).T  # (G, P)
    w_p = jnp.pad(w_eff.astype(jnp.bfloat16), ((0, G_pad - G), (0, P_pad - P)))
    b_p = jnp.pad(bias.astype(jnp.float32), (0, P_pad - P)).reshape(1, P_pad)

    meta = dict(n_pathways=P, n_genes=G, tile_p=tp, tile_g=tg)
    return w_p, b_p, meta


@functools.partial(
    jax.jit,
    static_argnames=("n_pathways", "n_genes", "tile_p", "tile_g", "tile_b"),
)
def sparse_mlp_forward(x, w_p, b_p, *, n_pathways, n_genes, tile_p, tile_g,
                       tile_b=256):
    """x: (B, n_genes) f32; w_p: (G_pad, P_pad) bf16; b_p: (1, P_pad) f32.
    Returns (B, n_pathways) f32."""
    B, G = x.shape
    assert G == n_genes, (G, n_genes)
    G_pad, P_pad = w_p.shape

    # bf16 operand tiles need a sublane multiple of 16 on the second-to-last dim.
    tb = tile_b if B >= tile_b else _round_up(B, 16)
    B_pad = _round_up(B, tb)

    # Zero padding is semantics-preserving: padded G columns of x multiply
    # padded (zero) rows of w_p; padded P columns are sliced off at the end.
    x_p = jnp.pad(x.astype(jnp.bfloat16), ((0, B_pad - B), (0, G_pad - G)))

    grid = (B_pad // tb, P_pad // tile_p, G_pad // tile_g)

    cost = pl.CostEstimate(
        flops=2 * B_pad * P_pad * G_pad,
        transcendentals=B_pad * P_pad,
        bytes_accessed=(2 * (B_pad * G_pad + G_pad * P_pad)
                        + 4 * (P_pad + B_pad * P_pad)),
    )

    out_pad = pl.pallas_call(
        sparse_mlp_kernel,
        out_shape=jax.ShapeDtypeStruct((B_pad, P_pad), jnp.float32),
        grid_spec=pltpu.PrefetchScalarGridSpec(
            num_scalar_prefetch=0,
            grid=grid,
            in_specs=[
                pl.BlockSpec((tb, tile_g), lambda i, j, k: (i, k)),      # x tile
                pl.BlockSpec((tile_g, tile_p), lambda i, j, k: (k, j)),  # weight tile
                pl.BlockSpec((1, tile_p), lambda i, j, k: (0, j)),       # bias tile
            ],
            out_specs=pl.BlockSpec((tb, tile_p), lambda i, j, k: (i, j)),
            scratch_shapes=[pltpu.VMEM((tb, tile_p), jnp.float32)],
        ),
        compiler_params=pltpu.CompilerParams(
            dimension_semantics=("parallel", "parallel", "arbitrary"),
            vmem_limit_bytes=32 * 1024 * 1024,
        ),
        cost_estimate=cost,
    )(x_p, w_p, b_p)

    return out_pad[:B, :n_pathways]


def sparse_mlp(x, weight, mask, bias, **tile_kwargs):
    """Convenience one-shot wrapper (prepare + forward)."""
    w_p, b_p, meta = prepare_sparse_mlp_params(weight, mask, bias)
    return sparse_mlp_forward(x, w_p, b_p, **meta, **tile_kwargs)


if __name__ == "__main__":
    # Small, deterministic problem: 8 samples, 32 genes, 16 pathways.
    B, n_genes, n_pathways = 8, 32, 16

    key = jax.random.PRNGKey(0)
    kx, kw, kb, km = jax.random.split(key, 4)

    x = jax.random.normal(kx, (B, n_genes), dtype=jnp.float32)

    # Deterministic "checkpoint-free" parameter init (mimics nn.Linear uniform init).
    bound = 1.0 / (n_genes ** 0.5)
    weight = jax.random.uniform(
        kw, (n_pathways, n_genes), minval=-bound, maxval=bound, dtype=jnp.float32)
    bias = jax.random.uniform(
        kb, (n_pathways,), minval=-bound, maxval=bound, dtype=jnp.float32)

    # Binary pathway membership mask (~30% density), deterministic.
    pathway_mask = (
        jax.random.uniform(km, (n_pathways, n_genes)) < 0.3
    ).astype(jnp.float32)

    # Parameters are prepared once (mask fold + transpose + bf16 cast + pad)
    # and reused across forward calls.
    w_p, b_p, meta = prepare_sparse_mlp_params(weight, pathway_mask, bias)

    out = sparse_mlp_forward(x, w_p, b_p, **meta)
    out = jax.block_until_ready(out)

    # Reference check in plain JAX (same semantics as the PyTorch forward).
    # bf16 operand streaming => compare with a looser tolerance than f32.
    ref = jnp.tanh(x @ (weight * pathway_mask).T + bias)
    assert out.shape == (B, n_pathways)
    assert jnp.allclose(out, ref, atol=2e-2, rtol=2e-2)

    print("KERNEL_OK")
</pallas_src>

<mosaic_0001>
module attributes {stable_mosaic.version = 11 : i64} {
  func.func @sparse_mlp_kernel(%arg0: i32, %arg1: i32, %arg2: i32, %arg3: memref<16x128xbf16, #tpu.memory_space<vmem>>, %arg4: memref<128x128xbf16, #tpu.memory_space<vmem>>, %arg5: memref<1x128xf32, #tpu.memory_space<vmem>>, %arg6: memref<16x128xf32, #tpu.memory_space<vmem>>, %arg7: memref<16x128xf32, #tpu.memory_space<vmem>>) attributes {dimension_semantics = [#tpu.dimension_semantics<parallel>, #tpu.dimension_semantics<parallel>, #tpu.dimension_semantics<arbitrary>], iteration_bounds = array<i64: 1, 1, 1>, scalar_prefetch = 0 : i64, scratch_operands = 1 : i64, tpu.core_type = #tpu.core_type<tc>, window_params = [{transform_indices = @transform_0, window_bounds = array<i64: 16, 128>}, {transform_indices = @transform_1, window_bounds = array<i64: 128, 128>}, {transform_indices = @transform_2, window_bounds = array<i64: 1, 128>}, {transform_indices = @transform_3, window_bounds = array<i64: 16, 128>}]} {
    %c0 = arith.constant 0 : index
    %c0_0 = arith.constant 0 : index
    %0 = vector.load %arg3[%c0, %c0_0] : memref<16x128xbf16, #tpu.memory_space<vmem>>, vector<16x128xbf16>
    %c0_1 = arith.constant 0 : index
    %c0_2 = arith.constant 0 : index
    %1 = vector.load %arg4[%c0_1, %c0_2] : memref<128x128xbf16, #tpu.memory_space<vmem>>, vector<128x128xbf16>
    %cst = arith.constant dense<0.000000e+00> : vector<16x128xf32>
    %2 = tpu.matmul %0, %1, %cst {dimension_numbers = #tpu.dot_dimension_numbers<[1], [0], [0], [1], [0, 0, 1, 1], [], []>} : vector<16x128xbf16>, vector<128x128xbf16>, vector<16x128xf32> -> vector<16x128xf32>
    %c0_i32 = arith.constant 0 : i32
    %3 = arith.cmpi eq, %arg2, %c0_i32 : i32
    %4 = arith.extui %3 : i1 to i32
    %c0_i32_3 = arith.constant 0 : i32
    %5 = arith.cmpi ne, %4, %c0_i32_3 : i32
    scf.if %5 {
      %c0_8 = arith.constant 0 : index
      %c0_9 = arith.constant 0 : index
      %12 = vector.load %arg7[%c0_8, %c0_9] : memref<16x128xf32, #tpu.memory_space<vmem>>, vector<16x128xf32>
      tpu.vector_store %arg7[%c0_8, %c0_9], %2 {strides = array<i32>} : memref<16x128xf32, #tpu.memory_space<vmem>>, vector<16x128xf32>,
    } else {
    }
    %c0_i32_4 = arith.constant 0 : i32
    %6 = arith.cmpi ne, %arg2, %c0_i32_4 : i32
    %7 = arith.extui %6 : i1 to i32
    %c0_i32_5 = arith.constant 0 : i32
    %8 = arith.cmpi ne, %7, %c0_i32_5 : i32
    scf.if %8 {
      %c0_8 = arith.constant 0 : index
      %c0_9 = arith.constant 0 : index
      %12 = vector.load %arg7[%c0_8, %c0_9] : memref<16x128xf32, #tpu.memory_space<vmem>>, vector<16x128xf32>
      %13 = arith.addf %12, %2 : vector<16x128xf32>
      %c0_10 = arith.constant 0 : index
      %c0_11 = arith.constant 0 : index
      %14 = vector.load %arg7[%c0_10, %c0_11] : memref<16x128xf32, #tpu.memory_space<vmem>>, vector<16x128xf32>
      tpu.vector_store %arg7[%c0_10, %c0_11], %13 {strides = array<i32>} : memref<16x128xf32, #tpu.memory_space<vmem>>, vector<16x128xf32>,
    } else {
    }
    %c0_i32_6 = arith.constant 0 : i32
    %9 = arith.cmpi eq, %arg2, %c0_i32_6 : i32
    %10 = arith.extui %9 : i1 to i32
    %c0_i32_7 = arith.constant 0 : i32
    %11 = arith.cmpi ne, %10, %c0_i32_7 : i32
    scf.if %11 {
      %c0_8 = arith.constant 0 : index
      %c0_9 = arith.constant 0 : index
      %12 = vector.load %arg7[%c0_8, %c0_9] : memref<16x128xf32, #tpu.memory_space<vmem>>, vector<16x128xf32>
      %c0_10 = arith.constant 0 : index
      %c0_11 = arith.constant 0 : index
      %13 = vector.load %arg5[%c0_10, %c0_11] : memref<1x128xf32, #tpu.memory_space<vmem>>, vector<1x128xf32>
      %14 = vector.broadcast %13 : vector<1x128xf32> to vector<16x128xf32>
      %15 = arith.addf %12, %14 : vector<16x128xf32>
      %16 = math.tanh %15 : vector<16x128xf32>
      %c0_12 = arith.constant 0 : index
      %c0_13 = arith.constant 0 : index
      %17 = vector.load %arg6[%c0_12, %c0_13] : memref<16x128xf32, #tpu.memory_space<vmem>>, vector<16x128xf32>
      tpu.vector_store %arg6[%c0_12, %c0_13], %16 {strides = array<i32>} : memref<16x128xf32, #tpu.memory_space<vmem>>, vector<16x128xf32>,
    } else {
    }
    return
  }
  func.func @transform_0(%arg0: i32, %arg1: i32, %arg2: i32) -> (i32, i32) {
    %c0_i32 = arith.constant 0 : i32
    return %arg0, %arg2 : i32, i32
  }
  func.func @transform_1(%arg0: i32, %arg1: i32, %arg2: i32) -> (i32, i32) {
    %c0_i32 = arith.constant 0 : i32
    return %arg2, %arg1 : i32, i32
  }
  func.func @transform_2(%arg0: i32, %arg1: i32, %arg2: i32) -> (i32, i32) {
    %c0_i32 = arith.constant 0 : i32
    %c0_i32_0 = arith.constant 0 : i32
    return %c0_i32, %arg1 : i32, i32
  }
  func.func @transform_3(%arg0: i32, %arg1: i32, %arg2: i32) -> (i32, i32) {
    %c0_i32 = arith.constant 0 : i32
    return %arg0, %arg1 : i32, i32
  }
}

</mosaic_0001>

<llo_original>
// kernel: sparse_mlp_forward.1
$region0: #{sparse_mlp_forward.1}
  #allocation0 [shape = 'u32[]', space=smem, size = 0x4, offset = 0x4, fixed_abs, tag = 'smem constant byte address 0x4 - core index']
  #allocation1 [shape = 'u32[144,128]{1,0:T(1,128)}', space=vmem, size = 0x12000, scoped, tag = 'internal scratch']
  #allocation2 [shape = 'f32[16,128]{1,0:T(8,128)}', space=vmem, size = 0x2000, scoped, tag = 'scratch operand']
  %s0 = inlined_call_operand.vmem [shape: bf16[16,128], index: 0, kind: input, shape index: {}]
  %s1 = inlined_call_operand.hbm [shape: bf16[128,128], index: 1, kind: input, shape index: {}]
  %s2 = inlined_call_operand.vmem [shape: f32[1,128], index: 2, kind: input, shape index: {}]
  %s3 = inlined_call_operand.vmem [shape: f32[16,128], index: 3, kind: output, shape index: {}]
  %s4 = sld [smem:[#allocation0]]
  $region38: #{sparse_mlp_forward.1} parent=0
    _
  %s6 = ssub.s32 1, %s4
  %s7 = scalar_select 0, %s6, %s4
  $region1: #{sparse_mlp_forward.1} parent=0
    #allocation3 [shape = 'u8[32768]{0}', space=vmem, size = 0x8000, scoped, tag = 'input window, operand 1, single buffered']
    #allocation4 [shape = 's32[1]{0}', space=sflag, size = 0x4, scoped, tag = 'scoped memory for sparse_mlp_forward.1']
    %8 = vsyncpa [#allocation4], 0
    // Predicated region
    $region2: #{sparse_mlp_forward.1} parent=1 // pred_check
      _
    $region3: #{sparse_mlp_forward.1} parent=1 // pred_check_branch
      %10 = sbr.rel (0) target = $region5
    $region4: #{sparse_mlp_forward.1} parent=1 // pred_region
      _
    $region5: #{sparse_mlp_forward.1} parent=1 // pred_fallthru
      _
    // Predicated region
    $region6: #{sparse_mlp_forward.1} parent=1 // pred_check
      _
    $region7: #{sparse_mlp_forward.1} parent=1 // pred_check_branch
      %12 = sbr.rel (0) target = $region9
    $region8: #{sparse_mlp_forward.1} parent=1 // pred_region
      %s14 = ssub.s32 1024, 1024
      %15 = vsyncadd [#allocation4], %s14
      %s16 = sshll.u32 [#allocation3], 4
      %s17 = int_to_ptr.vmem [resolvable:$true] %s16
      %22 = dma.hbm_to_vmem [thread:$0]  %s1, 1024, %s17, [#allocation4], 64, 64, 4
    $region9: #{sparse_mlp_forward.1} parent=1 // pred_fallthru
      _
    // Predicated region
    $region10: #{sparse_mlp_forward.1} parent=1 // pred_check
      _
    $region11: #{sparse_mlp_forward.1} parent=1 // pred_check_branch
      %24 = sbr.rel (0) target = $region13
    $region12: #{sparse_mlp_forward.1} parent=1 // pred_region
      _
    $region13: #{sparse_mlp_forward.1} parent=1 // pred_fallthru
      _
    // Predicated region
    $region14: #{sparse_mlp_forward.1} parent=1 // pred_check
      _
    $region15: #{sparse_mlp_forward.1} parent=1 // pred_check_branch
      %26 = sbr.rel (0) target = $region17
    $region16: #{sparse_mlp_forward.1} parent=1 // pred_region
      %27 = dma.done [#allocation4], 1024
    $region17: #{sparse_mlp_forward.1} parent=1 // pred_fallthru
      _
    %v29 = vld [vmem:[%s0] sm:$0xf]
    %v30 = vld [vmem:[%s0 + $0x4] sm:$0xf]
    %v31 = vld [vmem:[#allocation3] sm:$0xf]
    %v32 = vld [vmem:[#allocation3 + $0x4] sm:$0xf]
    %v33 = vld [vmem:[#allocation3 + $0x8] sm:$0xf]
    %v34 = vld [vmem:[#allocation3 + $0xc] sm:$0xf]
    %v35 = vld [vmem:[#allocation3 + $0x10] sm:$0xf]
    %v36 = vld [vmem:[#allocation3 + $0x14] sm:$0xf]
    %v37 = vld [vmem:[#allocation3 + $0x18] sm:$0xf]
    %v38 = vld [vmem:[#allocation3 + $0x1c] sm:$0xf]
    %v39 = vld [vmem:[#allocation3 + $0x20] sm:$0xf]
    %v40 = vld [vmem:[#allocation3 + $0x24] sm:$0xf]
    %v41 = vld [vmem:[#allocation3 + $0x28] sm:$0xf]
    %v42 = vld [vmem:[#allocation3 + $0x2c] sm:$0xf]
    %v43 = vld [vmem:[#allocation3 + $0x30] sm:$0xf]
    %v44 = vld [vmem:[#allocation3 + $0x34] sm:$0xf]
    %v45 = vld [vmem:[#allocation3 + $0x38] sm:$0xf]
    %v46 = vld [vmem:[#allocation3 + $0x3c] sm:$0xf]
    %v49 = vunpack.c.l.b16 %v29
    %v50 = vunpack.c.l.b16 %v30
    %v51 = vpack.c.b16 %v50, %v49
    %v69 = vunpack.c.l.b16 %v31
    %v70 = vunpack.c.l.b16 %v32
    %v71 = vunpack.c.l.b16 %v33
    %v72 = vunpack.c.l.b16 %v34
    %v73 = vunpack.c.l.b16 %v35
    %v74 = vunpack.c.l.b16 %v36
    %v75 = vunpack.c.l.b16 %v37
    %v76 = vunpack.c.l.b16 %v38
    %v77 = vunpack.c.l.b16 %v39
    %v78 = vunpack.c.l.b16 %v40
    %v79 = vunpack.c.l.b16 %v41
    %v80 = vunpack.c.l.b16 %v42
    %v81 = vunpack.c.l.b16 %v43
    %v82 = vunpack.c.l.b16 %v44
    %v83 = vunpack.c.l.b16 %v45
    %v84 = vunpack.c.l.b16 %v46
    %v85 = vpack.c.b16 %v70, %v69
    %v86 = vpack.c.b16 %v72, %v71
    %v87 = vpack.c.b16 %v74, %v73
    %v88 = vpack.c.b16 %v76, %v75
    %v89 = vpack.c.b16 %v78, %v77
    %v90 = vpack.c.b16 %v80, %v79
    %v91 = vpack.c.b16 %v82, %v81
    %v92 = vpack.c.b16 %v84, %v83
    %101 = vmatprep.subr.bf16.mxu0 0
    %102 = vmatpush1.bf16.msra.mxu0 %v85
    %103 = vmatprep.subr.bf16.mxu0 0
    %104 = vmatpush1.bf16.msra.mxu0 %v86
    %105 = vmatprep.subr.bf16.mxu0 0
    %106 = vmatpush1.bf16.msra.mxu0 %v87
    %107 = vmatprep.subr.bf16.mxu0 0
    %108 = vmatpush1.bf16.msra.mxu0 %v88
    %109 = vmatprep.subr.bf16.mxu0 0
    %110 = vmatpush1.bf16.msra.mxu0 %v89
    %111 = vmatprep.subr.bf16.mxu0 0
    %112 = vmatpush1.bf16.msra.mxu0 %v90
    %113 = vmatprep.subr.bf16.mxu0 0
    %114 = vmatpush1.bf16.msra.mxu0 %v91
    %115 = vmatprep.subr.bf16.mxu0 0
    %116 = vmatpush1.bf16.msra.mxu0 %v92
    %117 = vmatprep.subr.bf16.mxu0 0
    %118 = vmatpush1.bf16.msra.mxu0 0
    %119 = vmatprep.subr.bf16.mxu0 0
    %120 = vmatpush1.bf16.msra.mxu0 0
    %121 = vmatprep.subr.bf16.mxu0 0
    %122 = vmatpush1.bf16.msra.mxu0 0
    %123 = vmatprep.subr.bf16.mxu0 0
    %124 = vmatpush1.bf16.msra.mxu0 0
    %125 = vmatprep.subr.bf16.mxu0 0
    %126 = vmatpush1.bf16.msra.mxu0 0
    %127 = vmatprep.subr.bf16.mxu0 0
    %128 = vmatpush1.bf16.msra.mxu0 0
    %129 = vmatprep.subr.bf16.mxu0 0
    %130 = vmatpush1.bf16.msra.mxu0 0
    %131 = vmatprep.subr.bf16.mxu0 0
    %132 = vmatpush1.bf16.msra.mxu0 0
    %133 = vmatprep.mubr.bf16.mxu0 0
    %134 = vmatmul.mubr.bf16.gmra.mrb[0].mxu0 %v51
    %v135 = vpop.f32.mrb[0].mxu0
    %v136 = vadd.f32 0.0, %v135
    %v137 = vpop.f32.mrb[0].mxu0
    %v138 = vpop.f32.mrb[0].mxu0
    %v139 = vadd.f32 0.0, %v138
    %v140 = vpop.f32.mrb[0].mxu0
    %141 = vdwg.mxu0
    %p142 = scmp.eq.s32.totalorder 0, 0
    // Predicated region
    $region18: #{sparse_mlp_forward.1} parent=1 // pred_check
      %p143 = pneg %p142
    $region19: #{sparse_mlp_forward.1} parent=1 // pred_check_branch
      %145 = sbr.rel (%p143) target = $region21
    $region20: #{sparse_mlp_forward.1} parent=1 // pred_region
      %146 = vst [vmem:[#allocation2] sm:$0xff] %v136
      %147 = vst [vmem:[#allocation2 + $0x8] sm:$0xff] %v139
    $region21: #{sparse_mlp_forward.1} parent=1 // pred_fallthru
      _
    %p148 = scmp.ne.s32.totalorder 0, 0
    // Predicated region
    $region22: #{sparse_mlp_forward.1} parent=1 // pred_check
      %p149 = pneg %p148
    $region23: #{sparse_mlp_forward.1} parent=1 // pred_check_branch
      %151 = sbr.rel (%p149) target = $region25
    $region24: #{sparse_mlp_forward.1} parent=1 // pred_region
      %v152 = vld [vmem:[#allocation2] sm:$0xff]
      %v153 = vld [vmem:[#allocation2 + $0x8] sm:$0xff]
      %v154 = vadd.f32 %v152, %v136
      %v155 = vadd.f32 %v153, %v139
      %156 = vst [vmem:[#allocation2] sm:$0xff] %v154
      %157 = vst [vmem:[#allocation2 + $0x8] sm:$0xff] %v155
    $region25: #{sparse_mlp_forward.1} parent=1 // pred_fallthru
      _
    // Predicated region
    $region26: #{sparse_mlp_forward.1} parent=1 // pred_check
      %p158 = pneg %p142
    $region27: #{sparse_mlp_forward.1} parent=1 // pred_check_branch
      %160 = sbr.rel (%p158) target = $region29
    $region28: #{sparse_mlp_forward.1} parent=1 // pred_region
      %v161 = vld [vmem:[#allocation2] sm:$0xff]
      %v162 = vld [vmem:[#allocation2 + $0x8] sm:$0xff]
      %v163 = vld [vmem:[%s2] sm:$0x1]
      %v165 = vlaneseq
      %v166 = vshrl.u32 %v165, 7
      %v167 = vsub.s32 0, %v166
      %v168 = vrot.slane %v163, %v167
      %v170 = vadd.f32 %v161, %v168
      %v171 = vadd.f32 %v162, %v168
      %v172 = vtanh.pop %v170
      %v173 = vtanh.pop %v171
      %174 = vst [vmem:[%s3] sm:$0xff] %v172
      %175 = vst [vmem:[%s3 + $0x8] sm:$0xff] %v173
    $region29: #{sparse_mlp_forward.1} parent=1 // pred_fallthru
      _
    // Predicated region
    $region30: #{sparse_mlp_forward.1} parent=1 // pred_check
      _
    $region31: #{sparse_mlp_forward.1} parent=1 // pred_check_branch
      %177 = sbr.rel (0) target = $region33
    $region32: #{sparse_mlp_forward.1} parent=1 // pred_region
      _
    $region33: #{sparse_mlp_forward.1} parent=1 // pred_fallthru
      _
    // Predicated region
    $region34: #{sparse_mlp_forward.1} parent=1 // pred_check
      _
    $region35: #{sparse_mlp_forward.1} parent=1 // pred_check_branch
      %179 = sbr.rel (0) target = $region37
    $region36: #{sparse_mlp_forward.1} parent=1 // pred_region
      _
    $region37: #{sparse_mlp_forward.1} parent=1 // pred_fallthru
      _
    %180 = vsyncpa [#allocation4], 1

</llo_original>
